<compile_context>
chip_gen: v7x
topology: tpu7x:2x2x1
jax: 0.10.0
libtpu: 0.0.40
codegen_flags: <defaults>
</compile_context>

<pallas_src>
from functools import partial

import jax
import jax.numpy as jnp
from jax.experimental import pallas as pl
from jax.experimental.pallas import tpu as pltpu

_LANE = 128


def _hswish_kernel(x_ref, o_ref):
    x = x_ref[...]
    # hard swish: x * relu6(x + 3) / 6  == x * clamp(x + 3, 0, 6) * (1/6)
    r6 = jnp.clip(x + 3.0, 0.0, 6.0)
    o_ref[...] = (x * r6 * (1.0 / 6.0)).astype(o_ref.dtype)


def _pick_width(n: int) -> int:
    """Widest power-of-two multiple of 128 that exactly divides n (0 if none)."""
    for w in (4096, 2048, 1024, 512, 256, 128):
        if n % w == 0:
            return w
    return 0


@partial(jax.jit, static_argnames=("target_block_bytes",))
def h_swish(feature: jax.Array, *, target_block_bytes: int = 2 * 1024 * 1024) -> jax.Array:
    """Elementwise hard swish over an arbitrary-shape tensor via a Pallas TPU kernel."""
    orig_shape = feature.shape
    dtype = feature.dtype
    n = feature.size
    if n == 0:
        return feature

    # Lane-dense 2D view. Prefer a width that divides n exactly (no padding at
    # all); fall back to a <128-element pad only for pathological sizes.
    w = _pick_width(n)
    pad = 0
    if w == 0:
        w = _LANE
        pad = (-n) % _LANE

    flat = feature.reshape(-1)
    if pad:
        flat = jnp.pad(flat, (0, pad))
    rows = (n + pad) // w
    x2d = flat.reshape(rows, w)

    # Block sizing: ~target_block_bytes per block, rows rounded to the sublane
    # packing granularity (8 for 32-bit, 16 for 16-bit, 32 for 8-bit dtypes).
    itemsize = jnp.dtype(dtype).itemsize
    pack = 8 * max(1, 4 // itemsize)
    tile_rows = max(pack, (target_block_bytes // (w * itemsize)) // pack * pack)
    if rows <= tile_rows:
        # Single full-extent block (always a legal block shape).
        tile_rows = rows

    grid = (pl.cdiv(rows, tile_rows),)  # partial last block is masked by Pallas

    out2d = pl.pallas_call(
        _hswish_kernel,
        out_shape=jax.ShapeDtypeStruct((rows, w), dtype),
        grid=grid,
        in_specs=[pl.BlockSpec((tile_rows, w), lambda i: (i, 0))],
        out_specs=pl.BlockSpec((tile_rows, w), lambda i: (i, 0)),
        compiler_params=pltpu.CompilerParams(
            dimension_semantics=("parallel",),      # megacore sharding on v7x
            vmem_limit_bytes=32 * 1024 * 1024,      # 2 MiB blocks x 2 arrays x 2 bufs << 32 MiB
        ),
    )(x2d)

    out_flat = out2d.reshape(-1)
    if pad:
        out_flat = out_flat[:n]
    return out_flat.reshape(orig_shape)


if __name__ == "__main__":
    key = jax.random.PRNGKey(0)
    # NCHW, small shapes: batch=2, channels=4, spatial=16x16
    x = jax.random.normal(key, (2, 4, 16, 16), dtype=jnp.float32) * 4.0

    y = jax.block_until_ready(h_swish(x))

    # Reference check (pure JAX) to validate semantics.
    y_ref = x * jnp.clip(x + 3.0, 0.0, 6.0) / 6.0
    assert y.shape == x.shape and y.dtype == x.dtype
    assert jnp.allclose(y, y_ref, atol=1e-6, rtol=1e-6)

    print("KERNEL_OK")
</pallas_src>

<mosaic_0001>
module attributes {stable_mosaic.version = 11 : i64} {
  func.func @_hswish_kernel(%arg0: i32, %arg1: memref<1x2048xf32, #tpu.memory_space<vmem>>, %arg2: memref<1x2048xf32, #tpu.memory_space<vmem>>) attributes {dimension_semantics = [#tpu.dimension_semantics<parallel>], iteration_bounds = array<i64: 1>, scalar_prefetch = 0 : i64, scratch_operands = 0 : i64, tpu.core_type = #tpu.core_type<tc>, window_params = [{transform_indices = @transform_0, window_bounds = array<i64: 1, 2048>}, {transform_indices = @transform_1, window_bounds = array<i64: 1, 2048>}]} {
    %c0 = arith.constant 0 : index
    %c0_0 = arith.constant 0 : index
    %0 = vector.load %arg1[%c0, %c0_0] : memref<1x2048xf32, #tpu.memory_space<vmem>>, vector<1x2048xf32>
    %cst = arith.constant 3.000000e+00 : f32
    %1 = vector.broadcast %cst : f32 to vector<1x2048xf32>
    %2 = arith.addf %0, %1 : vector<1x2048xf32>
    %cst_1 = arith.constant 0.000000e+00 : f32
    %cst_2 = arith.constant 6.000000e+00 : f32
    %3 = vector.broadcast %cst_1 : f32 to vector<1x2048xf32>
    %4 = arith.maximumf %3, %2 : vector<1x2048xf32>
    %5 = vector.broadcast %cst_2 : f32 to vector<1x2048xf32>
    %6 = arith.minimumf %5, %4 : vector<1x2048xf32>
    %7 = arith.mulf %0, %6 : vector<1x2048xf32>
    %cst_3 = arith.constant 0.166666672 : f32
    %8 = vector.broadcast %cst_3 : f32 to vector<1x2048xf32>
    %9 = arith.mulf %7, %8 : vector<1x2048xf32>
    %c0_4 = arith.constant 0 : index
    %c0_5 = arith.constant 0 : index
    %10 = vector.load %arg2[%c0_4, %c0_5] : memref<1x2048xf32, #tpu.memory_space<vmem>>, vector<1x2048xf32>
    tpu.vector_store %arg2[%c0_4, %c0_5], %9 {strides = array<i32>} : memref<1x2048xf32, #tpu.memory_space<vmem>>, vector<1x2048xf32>,
    return
  }
  func.func @transform_0(%arg0: i32) -> (i32, i32) {
    %c0_i32 = arith.constant 0 : i32
    %c0_i32_0 = arith.constant 0 : i32
    return %arg0, %c0_i32 : i32, i32
  }
  func.func @transform_1(%arg0: i32) -> (i32, i32) {
    %c0_i32 = arith.constant 0 : i32
    %c0_i32_0 = arith.constant 0 : i32
    return %arg0, %c0_i32 : i32, i32
  }
}

</mosaic_0001>

<llo_original>
// kernel: h_swish.1
$region0: #{h_swish.1}
  #allocation0 [shape = 'u32[]', space=smem, size = 0x4, offset = 0x4, fixed_abs, tag = 'smem constant byte address 0x4 - core index']
  #allocation1 [shape = 'u32[144,128]{1,0:T(1,128)}', space=vmem, size = 0x12000, scoped, tag = 'internal scratch']
  %s0 = inlined_call_operand.vmem [shape: f32[1,2048], index: 0, kind: input, shape index: {}]
  %s1 = inlined_call_operand.vmem [shape: f32[1,2048], index: 1, kind: output, shape index: {}]
  %s2 = sld [smem:[#allocation0]]
  $region14: #{h_swish.1} parent=0
    _
  %s4 = ssub.s32 1, %s2
  %s5 = scalar_select 0, %s4, %s2
  // Predicated region
  $region2: #{h_swish.1} parent=0 // pred_check
    _
  $region3: #{h_swish.1} parent=0 // pred_check_branch
    %7 = sbr.rel (0) target = $region5
  $region4: #{h_swish.1} parent=0 // pred_region
    _
  $region5: #{h_swish.1} parent=0 // pred_fallthru
    _
  %v8 = vld [vmem:[%s0] sm:$0xff]
  %v9 = vld [vmem:[%s0 + $0x8] sm:$0xff]
  %v10 = vadd.f32 %v8, 3.0
  %v11 = vadd.f32 %v9, 3.0
  %v12 = vmax.f32 %v10, 0.0
  %v13 = vmax.f32 %v11, 0.0
  %v14 = vmin.f32 %v12, 6.0
  %v15 = vmin.f32 %v13, 6.0
  %v16 = vmul.f32 %v8, %v14
  %v17 = vmul.f32 %v9, %v15
  %v18 = vmul.f32 %v16, 0.16666667
  %v19 = vmul.f32 %v17, 0.16666667
  %20 = vst [vmem:[%s1] sm:$0xff] %v18
  %21 = vst [vmem:[%s1 + $0x8] sm:$0xff] %v19
  // Predicated region
  $region6: #{h_swish.1} parent=0 // pred_check
    _
  $region7: #{h_swish.1} parent=0 // pred_check_branch
    %23 = sbr.rel (0) target = $region9
  $region8: #{h_swish.1} parent=0 // pred_region
    _
  $region9: #{h_swish.1} parent=0 // pred_fallthru
    _
  // Predicated region
  $region10: #{h_swish.1} parent=0 // pred_check
    _
  $region11: #{h_swish.1} parent=0 // pred_check_branch
    %25 = sbr.rel (0) target = $region13
  $region12: #{h_swish.1} parent=0 // pred_region
    _
  $region13: #{h_swish.1} parent=0 // pred_fallthru
    _

</llo_original>
